<compile_context>
chip_gen: v7x
topology: tpu7x:2x2x1
jax: 0.10.0
libtpu: 0.0.40
codegen_flags: <defaults>
</compile_context>

<pallas_src>
import functools

import jax
import jax.numpy as jnp
from jax import lax
from jax.experimental import pallas as pl
from jax.experimental.pallas import tpu as pltpu

_LANES = 128
_OUT_PAD = 128


def _round_up(n, m):
    return ((n + m - 1) // m) * m


def _mtl_kernel(num_tasks, task_ref,
                x_ref, ws_ref, bs_ref,         # shared layer
                wcat_ref, bcat_ref,            # [Wa | Wv@Wo@Wt] fused + padded
                wrow_ref,                      # padded wout row (elementwise head)
                bout_ref,                      # (T,) in SMEM
                o_ref):
    t = task_ref[0]

    # shared_output = relu(shared_layer(x))            (bm, H) fp32
    shared = jnp.maximum(
        jnp.dot(x_ref[...], ws_ref[...], preferred_element_type=jnp.float32)
        + bs_ref[...],
        0.0)

    # One wide matmul: columns [0, T) = attention logits,
    # columns [T, T+task_hidden) = fused task pre-activation, rest = 0.
    y = (jnp.dot(shared.astype(jnp.bfloat16), wcat_ref[...],
                 preferred_element_type=jnp.float32)
         + bcat_ref[...])                               # (bm, 128) fp32

    # Softmax over the first `num_tasks` columns, select column task_idx —
    # done lane-dense with iota masks (no sub-128 slicing).
    col = lax.broadcasted_iota(jnp.int32, y.shape, 1)
    is_logit = col < num_tasks
    masked = jnp.where(is_logit, y, jnp.float32(-1e30))
    m = jnp.max(masked, axis=1, keepdims=True)
    e = jnp.exp(masked - m)                             # 0 on non-logit columns
    denom = jnp.sum(e, axis=1, keepdims=True)
    e_t = jnp.sum(jnp.where(col == t, e, 0.0), axis=1, keepdims=True)
    scale = e_t * pl.reciprocal(denom, approx=True)     # softmax[:, task_idx]

    # relu(pre_act * scale) applied full-width; wrow is zero outside the task
    # columns, so the logit / pad columns contribute nothing to the output.
    gated = jnp.maximum(y * scale, 0.0)
    out = jnp.sum(gated * wrow_ref[...], axis=1, keepdims=True) + bout_ref[t]

    # Lane-dense 128-wide store (wrapper slices column 0).
    o_ref[...] = jnp.broadcast_to(out, o_ref.shape)


def prepare_fused_params(p):
    """One-time weight folding / stacking / casting (wrapper-side, XLA)."""
    T = len(p["wt"])
    H = p["ws"].shape[1]
    th = p["wt"][0].shape[1]
    cat = _round_up(T + th, _LANES)

    wo_eff = p["wv"] @ p["wo"]              # (H, H)   value-proj folded into out-proj
    bo_eff = p["bv"] @ p["wo"] + p["bo"]    # (1, H)

    wcat, bcat, wrow, bout = [], [], [], []
    for t in range(T):
        wf = wo_eff @ p["wt"][t]                        # (H, th)
        bf = bo_eff @ p["wt"][t] + p["bt"][t]           # (1, th)
        wc = jnp.concatenate([p["wa"], wf], axis=1)     # (H, T+th)
        bc = jnp.concatenate([p["ba"], bf], axis=1)     # (1, T+th)
        wc = jnp.pad(wc, ((0, 0), (0, cat - (T + th))))
        bc = jnp.pad(bc, ((0, 0), (0, cat - (T + th))))
        wr = jnp.zeros((1, cat), jnp.float32).at[:, T:T + th].set(p["wout"][t].T)
        wcat.append(wc)
        bcat.append(bc)
        wrow.append(wr)
        bout.append(p["bout"][t][0, 0])

    return {
        "ws": p["ws"].astype(jnp.bfloat16),                    # (in, H)
        "bs": p["bs"].astype(jnp.float32),                     # (1, H)
        "wcat": jnp.stack(wcat).astype(jnp.bfloat16),          # (T, H, cat)
        "bcat": jnp.stack(bcat).astype(jnp.float32),           # (T, 1, cat)
        "wout_row": jnp.stack(wrow).astype(jnp.float32),       # (T, 1, cat)
        "bout": jnp.stack(bout).astype(jnp.float32),           # (T,)
        "num_tasks": T,
        "task_hidden": th,
    }


def soft_sharing_mtl_forward(x, fused, task_idx, *, block_m=256):
    """x: (B, input_size) fp32; fused: output of prepare_fused_params."""
    B, in_dim = x.shape
    T = fused["num_tasks"]
    H = fused["ws"].shape[-1]
    cat = fused["wcat"].shape[-1]

    bm = min(block_m, _round_up(B, 8))
    b_pad = _round_up(B, bm)
    x_p = x.astype(jnp.bfloat16)
    if b_pad != B:
        x_p = jnp.pad(x_p, ((0, b_pad - B), (0, 0)))

    task_arr = jnp.asarray([task_idx], dtype=jnp.int32)

    out = pl.pallas_call(
        functools.partial(_mtl_kernel, T),
        out_shape=jax.ShapeDtypeStruct((b_pad, _OUT_PAD), jnp.float32),
        grid_spec=pltpu.PrefetchScalarGridSpec(
            num_scalar_prefetch=1,
            grid=(b_pad // bm,),
            in_specs=[
                pl.BlockSpec((bm, in_dim), lambda i, t: (i, 0)),            # x tile
                pl.BlockSpec((in_dim, H), lambda i, t: (0, 0)),             # Ws (resident)
                pl.BlockSpec((1, H), lambda i, t: (0, 0)),                  # bs
                pl.BlockSpec((None, H, cat), lambda i, t: (t[0], 0, 0)),    # fused W (task t)
                pl.BlockSpec((None, 1, cat), lambda i, t: (t[0], 0, 0)),    # fused b
                pl.BlockSpec((None, 1, cat), lambda i, t: (t[0], 0, 0)),    # wout row
                pl.BlockSpec(memory_space=pltpu.MemorySpace.SMEM),          # bout table
            ],
            out_specs=pl.BlockSpec((bm, _OUT_PAD), lambda i, t: (i, 0)),
        ),
        compiler_params=pltpu.CompilerParams(
            dimension_semantics=("parallel",)),
    )(task_arr, x_p, fused["ws"], fused["bs"], fused["wcat"],
      fused["bcat"], fused["wout_row"], fused["bout"])

    return out[:B, :1]


def init_params(key, input_size, shared_hidden, task_hidden, num_tasks):
    """Deterministic synthetic parameters (not a checkpoint load)."""
    ks = jax.random.split(key, 16)
    H, T = shared_hidden, num_tasks

    def w(k, shape, fan_in):
        return (jax.random.normal(k, shape, jnp.float32)
                / jnp.sqrt(fan_in)).astype(jnp.float32)

    return {
        # all weights stored as (in, out); biases as (1, out)
        "ws":   w(ks[0], (input_size, H), input_size),
        "bs":   w(ks[1], (1, H), H),
        "wa":   w(ks[2], (H, T), H),
        "ba":   w(ks[3], (1, T), H),
        # MHA: only V-projection and out-projection matter for seq_len == 1
        "wv":   w(ks[4], (H, H), H),
        "bv":   w(ks[5], (1, H), H),
        "wo":   w(ks[6], (H, H), H),
        "bo":   w(ks[7], (1, H), H),
        # per-task heads
        "wt":   [w(jax.random.fold_in(ks[8], t), (H, task_hidden), H) for t in range(T)],
        "bt":   [w(jax.random.fold_in(ks[9], t), (1, task_hidden), H) for t in range(T)],
        "wout": [w(jax.random.fold_in(ks[10], t), (task_hidden, 1), task_hidden) for t in range(T)],
        "bout": [w(jax.random.fold_in(ks[11], t), (1, 1), task_hidden) for t in range(T)],
    }


def _reference_fp32(x, p, task_idx):
    """Original (unfused) module math in fp32."""
    shared = jnp.maximum(x @ p["ws"] + p["bs"], 0.0)
    attn_w = jax.nn.softmax(shared @ p["wa"] + p["ba"], axis=1)
    attn_out = (shared @ p["wv"] + p["bv"]) @ p["wo"] + p["bo"]
    task = jnp.maximum(
        (attn_out @ p["wt"][task_idx] + p["bt"][task_idx])
        * attn_w[:, task_idx:task_idx + 1],
        0.0)
    return task @ p["wout"][task_idx] + p["bout"][task_idx]


def _reference_bf16(x, fused, task_idx):
    """Same math as the kernel (fused weights, bf16 MXU inputs, fp32 accum)."""
    T = fused["num_tasks"]
    xb = x.astype(jnp.bfloat16)
    shared = jnp.maximum(
        jnp.dot(xb, fused["ws"], preferred_element_type=jnp.float32) + fused["bs"], 0.0)
    y = (jnp.dot(shared.astype(jnp.bfloat16), fused["wcat"][task_idx],
                 preferred_element_type=jnp.float32) + fused["bcat"][task_idx])
    attn = jax.nn.softmax(y[:, :T], axis=1)
    scale = attn[:, task_idx:task_idx + 1]
    gated = jnp.maximum(y * scale, 0.0)
    return (jnp.sum(gated * fused["wout_row"][task_idx], axis=1, keepdims=True)
            + fused["bout"][task_idx])


if __name__ == "__main__":
    B, INPUT, SHARED_H, TASK_H, NUM_TASKS = 16, 32, 32, 32, 4
    TASK_IDX = 1

    key = jax.random.PRNGKey(0)
    kx, kp = jax.random.split(key)
    x = jax.random.normal(kx, (B, INPUT), jnp.float32)
    params = init_params(kp, INPUT, SHARED_H, TASK_H, NUM_TASKS)
    fused = prepare_fused_params(params)

    # block_m=8 -> 2 grid steps over the batch (demonstrates the batch grid).
    out = soft_sharing_mtl_forward(x, fused, TASK_IDX, block_m=8)
    out = jax.block_until_ready(out)
    assert out.shape == (B, 1)

    # Tight check vs. a reference that matches the kernel's bf16/fusion math.
    ref_bf16 = _reference_bf16(x, fused, TASK_IDX)
    assert jnp.allclose(out, ref_bf16, atol=2e-3, rtol=2e-3), "mismatch vs bf16 reference"

    # Loose check vs. the original fp32 module math (bf16 rounding tolerance).
    ref_fp32 = _reference_fp32(x, params, TASK_IDX)
    assert jnp.allclose(out, ref_fp32, atol=1e-1, rtol=1e-1), "mismatch vs fp32 reference"

    print("KERNEL_OK")
</pallas_src>

<mosaic_0001>
module attributes {stable_mosaic.version = 11 : i64} {
  func.func @_mtl_kernel(%arg0: i32, %arg1: memref<1xi32, #tpu.memory_space<smem>>, %arg2: memref<8x32xbf16, #tpu.memory_space<vmem>>, %arg3: memref<32x32xbf16, #tpu.memory_space<vmem>>, %arg4: memref<1x32xf32, #tpu.memory_space<vmem>>, %arg5: memref<1x32x128xbf16, #tpu.memory_space<vmem>>, %arg6: memref<1x1x128xf32, #tpu.memory_space<vmem>>, %arg7: memref<1x1x128xf32, #tpu.memory_space<vmem>>, %arg8: memref<4xf32, #tpu.memory_space<smem>>, %arg9: memref<8x128xf32, #tpu.memory_space<vmem>>) attributes {dimension_semantics = [#tpu.dimension_semantics<parallel>], iteration_bounds = array<i64: 2>, scalar_prefetch = 1 : i64, scratch_operands = 0 : i64, tpu.core_type = #tpu.core_type<tc>, window_params = [{transform_indices = @transform_0, window_bounds = array<i64: 8, 32>}, {pipeline_mode = #tpu.pipeline_mode<synchronous>, transform_indices = @transform_1, window_bounds = array<i64: 32, 32>}, {pipeline_mode = #tpu.pipeline_mode<synchronous>, transform_indices = @transform_2, window_bounds = array<i64: 1, 32>}, {transform_indices = @transform_3, window_bounds = array<i64: 1, 32, 128>}, {transform_indices = @transform_4, window_bounds = array<i64: 1, 1, 128>}, {transform_indices = @transform_5, window_bounds = array<i64: 1, 1, 128>}, {transform_indices = @transform_6, window_bounds = array<i64: 4>}, {transform_indices = @transform_7, window_bounds = array<i64: 8, 128>}]} {
    %c0 = arith.constant 0 : index
    %0 = memref.load %arg1[%c0] : memref<1xi32, #tpu.memory_space<smem>>
    %c0_0 = arith.constant 0 : index
    %c0_1 = arith.constant 0 : index
    %1 = vector.load %arg2[%c0_0, %c0_1] : memref<8x32xbf16, #tpu.memory_space<vmem>>, vector<8x32xbf16>
    %c0_2 = arith.constant 0 : index
    %c0_3 = arith.constant 0 : index
    %2 = vector.load %arg3[%c0_2, %c0_3] : memref<32x32xbf16, #tpu.memory_space<vmem>>, vector<32x32xbf16>
    %cst = arith.constant dense<0.000000e+00> : vector<8x32xf32>
    %3 = tpu.matmul %1, %2, %cst {dimension_numbers = #tpu.dot_dimension_numbers<[1], [0], [0], [1], [0, 0, 1, 1], [], []>} : vector<8x32xbf16>, vector<32x32xbf16>, vector<8x32xf32> -> vector<8x32xf32>
    %c0_4 = arith.constant 0 : index
    %c0_5 = arith.constant 0 : index
    %4 = vector.load %arg4[%c0_4, %c0_5] : memref<1x32xf32, #tpu.memory_space<vmem>>, vector<1x32xf32>
    %5 = vector.broadcast %4 : vector<1x32xf32> to vector<8x32xf32>
    %6 = arith.addf %3, %5 : vector<8x32xf32>
    %cst_6 = arith.constant 0.000000e+00 : f32
    %7 = vector.broadcast %cst_6 : f32 to vector<8x32xf32>
    %8 = arith.maximumf %6, %7 : vector<8x32xf32>
    %9 = arith.truncf %8 : vector<8x32xf32> to vector<8x32xbf16>
    %c0_7 = arith.constant 0 : index
    %c0_8 = arith.constant 0 : index
    %c0_9 = arith.constant 0 : index
    %10 = vector.load %arg5[%c0_7, %c0_8, %c0_9] : memref<1x32x128xbf16, #tpu.memory_space<vmem>>, vector<1x32x128xbf16>
    %11 = vector.shape_cast %10 : vector<1x32x128xbf16> to vector<32x128xbf16>
    %cst_10 = arith.constant dense<0.000000e+00> : vector<8x128xf32>
    %12 = tpu.matmul %9, %11, %cst_10 {dimension_numbers = #tpu.dot_dimension_numbers<[1], [0], [0], [1], [0, 0, 1, 1], [], []>} : vector<8x32xbf16>, vector<32x128xbf16>, vector<8x128xf32> -> vector<8x128xf32>
    %c0_11 = arith.constant 0 : index
    %c0_12 = arith.constant 0 : index
    %c0_13 = arith.constant 0 : index
    %13 = vector.load %arg6[%c0_11, %c0_12, %c0_13] : memref<1x1x128xf32, #tpu.memory_space<vmem>>, vector<1x1x128xf32>
    %14 = vector.shape_cast %13 : vector<1x1x128xf32> to vector<1x128xf32>
    %15 = vector.broadcast %14 : vector<1x128xf32> to vector<8x128xf32>
    %16 = arith.addf %12, %15 : vector<8x128xf32>
    %17 = tpu.iota {dimensions = array<i32: 1>} : vector<8x128xi32>
    %c4_i32 = arith.constant 4 : i32
    %18 = vector.broadcast %c4_i32 : i32 to vector<8x128xi32>
    %19 = arith.cmpi slt, %17, %18 : vector<8x128xi32>
    %cst_14 = arith.constant -1.000000e+30 : f32
    %20 = vector.broadcast %cst_14 : f32 to vector<8x128xf32>
    %21 = arith.select %19, %16, %20 : vector<8x128xi1>, vector<8x128xf32>
    %cst_15 = arith.constant dense<0xFF800000> : vector<8xf32>
    %22 = vector.multi_reduction <maximumf>, %21, %cst_15 [1] : vector<8x128xf32> to vector<8xf32>
    %23 = vector.shape_cast %22 : vector<8xf32> to vector<8x1xf32>
    %24 = vector.broadcast %23 : vector<8x1xf32> to vector<8x128xf32>
    %25 = arith.subf %21, %24 : vector<8x128xf32>
    %26 = math.exp %25 : vector<8x128xf32>
    %cst_16 = arith.constant dense<0.000000e+00> : vector<8xf32>
    %27 = vector.multi_reduction <add>, %26, %cst_16 [1] : vector<8x128xf32> to vector<8xf32>
    %28 = vector.shape_cast %27 : vector<8xf32> to vector<8x1xf32>
    %29 = vector.broadcast %0 : i32 to vector<8x128xi32>
    %30 = arith.cmpi eq, %17, %29 : vector<8x128xi32>
    %cst_17 = arith.constant 0.000000e+00 : f32
    %31 = vector.broadcast %cst_17 : f32 to vector<8x128xf32>
    %32 = arith.select %30, %26, %31 : vector<8x128xi1>, vector<8x128xf32>
    %cst_18 = arith.constant dense<0.000000e+00> : vector<8xf32>
    %33 = vector.multi_reduction <add>, %32, %cst_18 [1] : vector<8x128xf32> to vector<8xf32>
    %34 = vector.shape_cast %33 : vector<8xf32> to vector<8x1xf32>
    %35 = tpu.reciprocal %28 {approx = true} : vector<8x1xf32> -> vector<8x1xf32>
    %36 = arith.mulf %34, %35 : vector<8x1xf32>
    %37 = vector.broadcast %36 : vector<8x1xf32> to vector<8x128xf32>
    %38 = arith.mulf %16, %37 : vector<8x128xf32>
    %cst_19 = arith.constant 0.000000e+00 : f32
    %39 = vector.broadcast %cst_19 : f32 to vector<8x128xf32>
    %40 = arith.maximumf %38, %39 : vector<8x128xf32>
    %c0_20 = arith.constant 0 : index
    %c0_21 = arith.constant 0 : index
    %c0_22 = arith.constant 0 : index
    %41 = vector.load %arg7[%c0_20, %c0_21, %c0_22] : memref<1x1x128xf32, #tpu.memory_space<vmem>>, vector<1x1x128xf32>
    %42 = vector.shape_cast %41 : vector<1x1x128xf32> to vector<1x128xf32>
    %43 = vector.broadcast %42 : vector<1x128xf32> to vector<8x128xf32>
    %44 = arith.mulf %40, %43 : vector<8x128xf32>
    %cst_23 = arith.constant dense<0.000000e+00> : vector<8xf32>
    %45 = vector.multi_reduction <add>, %44, %cst_23 [1] : vector<8x128xf32> to vector<8xf32>
    %46 = vector.shape_cast %45 : vector<8xf32> to vector<8x1xf32>
    %47 = arith.index_cast %0 : i32 to index
    %48 = memref.load %arg8[%47] : memref<4xf32, #tpu.memory_space<smem>>
    %49 = vector.broadcast %48 : f32 to vector<8x1xf32>
    %50 = arith.addf %46, %49 : vector<8x1xf32>
    %51 = vector.shape_cast %50 : vector<8x1xf32> to vector<8x1xf32>
    %52 = vector.broadcast %51 : vector<8x1xf32> to vector<8x128xf32>
    %c0_24 = arith.constant 0 : index
    %c0_25 = arith.constant 0 : index
    %53 = vector.load %arg9[%c0_24, %c0_25] : memref<8x128xf32, #tpu.memory_space<vmem>>, vector<8x128xf32>
    tpu.vector_store %arg9[%c0_24, %c0_25], %52 {strides = array<i32>} : memref<8x128xf32, #tpu.memory_space<vmem>>, vector<8x128xf32>,
    return
  }
  func.func @transform_0(%arg0: i32, %arg1: memref<1xi32, #tpu.memory_space<smem>>) -> (i32, i32) {
    %c0_i32 = arith.constant 0 : i32
    %c0_i32_0 = arith.constant 0 : i32
    return %arg0, %c0_i32 : i32, i32
  }
  func.func @transform_1(%arg0: i32, %arg1: memref<1xi32, #tpu.memory_space<smem>>) -> (i32, i32) {
    %c0_i32 = arith.constant 0 : i32
    %c0_i32_0 = arith.constant 0 : i32
    %c0_i32_1 = arith.constant 0 : i32
    return %c0_i32, %c0_i32_0 : i32, i32
  }
  func.func @transform_2(%arg0: i32, %arg1: memref<1xi32, #tpu.memory_space<smem>>) -> (i32, i32) {
    %c0_i32 = arith.constant 0 : i32
    %c0_i32_0 = arith.constant 0 : i32
    %c0_i32_1 = arith.constant 0 : i32
    return %c0_i32, %c0_i32_0 : i32, i32
  }
  func.func @transform_3(%arg0: i32, %arg1: memref<1xi32, #tpu.memory_space<smem>>) -> (i32, i32, i32) {
    %c0 = arith.constant 0 : index
    %0 = memref.load %arg1[%c0] : memref<1xi32, #tpu.memory_space<smem>>
    %c0_i32 = arith.constant 0 : i32
    %c0_i32_0 = arith.constant 0 : i32
    %c0_i32_1 = arith.constant 0 : i32
    return %0, %c0_i32, %c0_i32_0 : i32, i32, i32
  }
  func.func @transform_4(%arg0: i32, %arg1: memref<1xi32, #tpu.memory_space<smem>>) -> (i32, i32, i32) {
    %c0 = arith.constant 0 : index
    %0 = memref.load %arg1[%c0] : memref<1xi32, #tpu.memory_space<smem>>
    %c0_i32 = arith.constant 0 : i32
    %c0_i32_0 = arith.constant 0 : i32
    %c0_i32_1 = arith.constant 0 : i32
    return %0, %c0_i32, %c0_i32_0 : i32, i32, i32
  }
  func.func @transform_5(%arg0: i32, %arg1: memref<1xi32, #tpu.memory_space<smem>>) -> (i32, i32, i32) {
    %c0 = arith.constant 0 : index
    %0 = memref.load %arg1[%c0] : memref<1xi32, #tpu.memory_space<smem>>
    %c0_i32 = arith.constant 0 : i32
    %c0_i32_0 = arith.constant 0 : i32
    %c0_i32_1 = arith.constant 0 : i32
    return %0, %c0_i32, %c0_i32_0 : i32, i32, i32
  }
  func.func @transform_6(%arg0: i32, %arg1: memref<1xi32, #tpu.memory_space<smem>>) -> i32 {
    %c0_i32 = arith.constant 0 : i32
    %c0_i32_0 = arith.constant 0 : i32
    return %c0_i32 : i32
  }
  func.func @transform_7(%arg0: i32, %arg1: memref<1xi32, #tpu.memory_space<smem>>) -> (i32, i32) {
    %c0_i32 = arith.constant 0 : i32
    %c0_i32_0 = arith.constant 0 : i32
    return %arg0, %c0_i32 : i32, i32
  }
}

</mosaic_0001>

<llo_original>
// kernel: tpu_custom_call.1
$region0: #{tpu_custom_call.1}
  #allocation0 [shape = 'u32[]', space=smem, size = 0x4, offset = 0x4, fixed_abs, tag = 'smem constant byte address 0x4 - core index']
  #allocation1 [shape = 'u32[144,128]{1,0:T(1,128)}', space=vmem, size = 0x12000, scoped, tag = 'internal scratch']
  #allocation2 [shape = 's32[1]{0}', space=sflag, size = 0x4, scoped, tag = 'scoped memory for tpu_custom_call.1']
  #allocation3 [shape = 's32[1]{0:T(128)S(6)}', space=smem, size = 0x200, scoped, tag = 'prefetched SMEM operand 0']
  %s0 = inlined_call_operand.<no memory space> [shape: s32[1], index: 0, kind: input, shape index: {}]
  %s1 = inlined_call_operand.hbm [shape: bf16[16,32], index: 1, kind: input, shape index: {}]
  %s2 = inlined_call_operand.hbm [shape: bf16[32,32], index: 2, kind: input, shape index: {}]
  %s3 = inlined_call_operand.vmem [shape: f32[1,32], index: 3, kind: input, shape index: {}]
  %s4 = inlined_call_operand.hbm [shape: bf16[4,32,128], index: 4, kind: input, shape index: {}]
  %s5 = inlined_call_operand.vmem [shape: f32[4,1,128], index: 5, kind: input, shape index: {}]
  %s6 = inlined_call_operand.vmem [shape: f32[4,1,128], index: 6, kind: input, shape index: {}]
  %s7 = inlined_call_operand.vmem [shape: f32[4], index: 7, kind: input, shape index: {}]
  %s8 = inlined_call_operand.hbm [shape: f32[16,128], index: 8, kind: output, shape index: {}]
  %s9 = sld [smem:[#allocation0]]
  $region77: #{tpu_custom_call.1} parent=0
    _
  %s11 = ssub.s32 1, %s9
  %s12 = scalar_select 0, %s11, %s9
  %13 = sst [smem:[#allocation3]] %s0
  $region1: #{tpu_custom_call.1} parent=0
    #allocation4 [shape = 'u8[4096]{0}', space=vmem, size = 0x1000, scoped, tag = 'input window, operand 1']
    #allocation5 [shape = 's32[2]{0}', space=sflag, size = 0x8, scoped, tag = 'scoped memory for tpu_custom_call.1']
    #allocation6 [shape = 's32[2]{0}', space=sflag, size = 0x8, scoped, tag = 'scoped memory for tpu_custom_call.1']
    #allocation7 [shape = 's32[2]{0}', space=sflag, size = 0x8, scoped, tag = 'scoped memory for tpu_custom_call.1']
    #allocation8 [shape = 'u8[8192]{0}', space=vmem, size = 0x2000, scoped, tag = 'input window, operand 2, single buffered']
    #allocation9 [shape = 's32[1]{0}', space=sflag, size = 0x4, scoped, tag = 'scoped memory for tpu_custom_call.1']
    #allocation10 [shape = 'u8[8192]{0}', space=vmem, size = 0x2000, scoped, tag = 'input window, operand 4, single buffered']
    #allocation11 [shape = 'u8[512]{0}', space=smem, size = 0x200, scoped, tag = 'input window, operand 7, single buffered']
    #allocation12 [shape = 'u8[8192]{0}', space=vmem, size = 0x2000, scoped, tag = 'output window, operand 0']
    %14 = vsyncpa [#allocation5], 0
    %s15 = scalar_lea.sflag [#allocation5], 1
    %16 = vsyncpa %s15, 0
    %17 = vsyncpa [#allocation9], 0
    %18 = vsyncpa [#allocation7], 0
    %19 = vsyncpa [#allocation6], 0
    %s20 = scalar_lea.sflag [#allocation6], 1
    %21 = vsyncpa %s20, 0
    loop: start=0, step=1, limit=4
    $region2: #{tpu_custom_call.1} parent=1 // loop_pre_header
      _
    $region3: #{tpu_custom_call.1} parent=1 // loop_header
      %s23 = sphi 0, %s27
      %p24 = scmp.ge.s32.totalorder %s23, 4
      %s33 = sphi 0, %s35
      %s36 = sphi 0, %s33
      %s37 = sphi 0, %s36
      %s53 = sphi 0, %s37
      %s57 = sphi 0, %s57
      %s59 = sphi 0, %s57
      %s60 = sphi 0, %s59
      %s74 = sphi 0, %s60
      %s78 = sphi 0, %s78
      %s80 = sphi 0, %s78
      %s81 = sphi 0, %s80
      %s95 = sphi 0, %s81
      %s103 = sphi 0, %s105
      %s106 = sphi 0, %s103
      %s107 = sphi 0, %s106
      %s123 = sphi 0, %s107
      %s131 = sphi 0, %s133
      %s134 = sphi 0, %s131
      %s135 = sphi 0, %s134
      %s151 = sphi 0, %s135
      %s159 = sphi 0, %s161
      %s162 = sphi 0, %s159
      %s163 = sphi 0, %s162
      %s179 = sphi 0, %s163
      %s183 = sphi 0, %s183
      %s185 = sphi 0, %s183
      %s186 = sphi 0, %s185
      %s200 = sphi 0, %s186
      %s206 = sphi 0, %s208
      %s209 = sphi 0, %s206
      %s210 = sphi 0, %s209
      %s226 = sphi 0, %s210
    $region4: #{tpu_custom_call.1} parent=1 // loop_header_branch
      %26 = sbr.rel (%p24) target = $region8
    $region5: #{tpu_custom_call.1} parent=1 // loop_body
      %s28 = ssub.s32 %s23, 1
      %s29 = ssub.s32 %s23, 2
      %s30 = sadd.s32 %s23, 1
      %s31 = ssub.s32 %s23, %s30
      %p32 = scmp.eq.s32.totalorder %s31, 0
      %s34 = sadd.s32 %s33, 1
      %s35 = scalar_select %p32, %s33, %s34
      %p38 = pneg %p32
      %p39 = scmp.eq.s32.totalorder %s23, 1
      %p40 = por %p38, %p39
      %p41 = scmp.ne.s32.totalorder %s33, %s36
      %p42 = scmp.eq.s32.totalorder %s23, 0
      %p43 = por %p41, %p42
      %p44 = scmp.ne.s32.totalorder %s33, %s36
      %p45 = scmp.eq.s32.totalorder %s28, 1
      %p46 = por %p44, %p45
      %p47 = scmp.ne.s32.totalorder %s36, %s37
      %p48 = scmp.eq.s32.totalorder %s28, 0
      %p49 = por %p47, %p48
      %p50 = scmp.ne.s32.totalorder %s36, %s37
      %p51 = scmp.eq.s32.totalorder %s29, 1
      %p52 = por %p50, %p51
      %p54 = scmp.ne.s32.totalorder %s37, %s53
      %p55 = scmp.eq.s32.totalorder %s29, 0
      %p56 = por %p54, %p55
      %s58 = sadd.s32 %s57, 1
      %p61 = scmp.eq.s32.totalorder %s23, 1
      %p62 = scmp.ne.s32.totalorder %s57, %s59
      %p63 = scmp.eq.s32.totalorder %s23, 0
      %p64 = por %p62, %p63
      %p65 = scmp.ne.s32.totalorder %s57, %s59
      %p66 = scmp.eq.s32.totalorder %s28, 1
      %p67 = por %p65, %p66
      %p68 = scmp.ne.s32.totalorder %s59, %s60
      %p69 = scmp.eq.s32.totalorder %s28, 0
      %p70 = por %p68, %p69
      %p71 = scmp.ne.s32.totalorder %s59, %s60
      %p72 = scmp.eq.s32.totalorder %s29, 1
      %p73 = por %p71, %p72
      %p75 = scmp.ne.s32.totalorder %s60, %s74
      %p76 = scmp.eq.s32.totalorder %s29, 0
      %p77 = por %p75, %p76
      %s79 = sadd.s32 %s78, 1
      %p82 = scmp.eq.s32.totalorder %s23, 1
      %p83 = scmp.ne.s32.totalorder %s78, %s80
      %p84 = scmp.eq.s32.totalorder %s23, 0
      %p85 = por %p83, %p84
      %p86 = scmp.ne.s32.totalorder %s78, %s80
      %p87 = scmp.eq.s32.totalorder %s28, 1
      %p88 = por %p86, %p87
      %p89 = scmp.ne.s32.totalorder %s80, %s81
      %p90 = scmp.eq.s32.totalorder %s28, 0
      %p91 = por %p89, %p90
      %p92 = scmp.ne.s32.totalorder %s80, %s81
      %p93 = scmp.eq.s32.totalorder %s29, 1
      %p94 = por %p92, %p93
      %p96 = scmp.ne.s32.totalorder %s81, %s95
      %p97 = scmp.eq.s32.totalorder %s29, 0
      %p98 = por %p96, %p97
      %s99 = sld [smem:[#allocation3]]
      %s100 = sld [smem:[#allocation3]]
      %s101 = ssub.s32 %s99, %s100
      %p102 = scmp.eq.s32.totalorder %s101, 0
      %s104 = sadd.s32 %s103, 1
      %s105 = scalar_select %p102, %s103, %s104
      %p108 = pneg %p102
      %p109 = scmp.eq.s32.totalorder %s23, 1
      %p110 = por %p108, %p109
      %p111 = scmp.ne.s32.totalorder %s103, %s106
      %p112 = scmp.eq.s32.totalorder %s23, 0
      %p113 = por %p111, %p112
      %p114 = scmp.ne.s32.totalorder %s103, %s106
      %p115 = scmp.eq.s32.totalorder %s28, 1
      %p116 = por %p114, %p115
      %p117 = scmp.ne.s32.totalorder %s106, %s107
      %p118 = scmp.eq.s32.totalorder %s28, 0
      %p119 = por %p117, %p118
      %p120 = scmp.ne.s32.totalorder %s106, %s107
      %p121 = scmp.eq.s32.totalorder %s29, 1
      %p122 = por %p120, %p121
      %p124 = scmp.ne.s32.totalorder %s107, %s123
      %p125 = scmp.eq.s32.totalorder %s29, 0
      %p126 = por %p124, %p125
      %s127 = sld [smem:[#allocation3]]
      %s128 = sld [smem:[#allocation3]]
      %s129 = ssub.s32 %s127, %s128
      %p130 = scmp.eq.s32.totalorder %s129, 0
      %s132 = sadd.s32 %s131, 1
      %s133 = scalar_select %p130, %s131, %s132
      %p136 = pneg %p130
      %p137 = scmp.eq.s32.totalorder %s23, 1
      %p138 = por %p136, %p137
      %p139 = scmp.ne.s32.totalorder %s131, %s134
      %p140 = scmp.eq.s32.totalorder %s23, 0
      %p141 = por %p139, %p140
      %p142 = scmp.ne.s32.totalorder %s131, %s134
      %p143 = scmp.eq.s32.totalorder %s28, 1
      %p144 = por %p142, %p143
      %p145 = scmp.ne.s32.totalorder %s134, %s135
      %p146 = scmp.eq.s32.totalorder %s28, 0
      %p147 = por %p145, %p146
      %p148 = scmp.ne.s32.totalorder %s134, %s135
      %p149 = scmp.eq.s32.totalorder %s29, 1
      %p150 = por %p148, %p149
      %p152 = scmp.ne.s32.totalorder %s135, %s151
      %p153 = scmp.eq.s32.totalorder %s29, 0
      %p154 = por %p152, %p153
      %s155 = sld [smem:[#allocation3]]
      %s156 = sld [smem:[#allocation3]]
      %s157 = ssub.s32 %s155, %s156
      %p158 = scmp.eq.s32.totalorder %s157, 0
      %s160 = sadd.s32 %s159, 1
      %s161 = scalar_select %p158, %s159, %s160
      %p164 = pneg %p158
      %p165 = scmp.eq.s32.totalorder %s23, 1
      %p166 = por %p164, %p165
      %p167 = scmp.ne.s32.totalorder %s159, %s162
      %p168 = scmp.eq.s32.totalorder %s23, 0
      %p169 = por %p167, %p168
      %p170 = scmp.ne.s32.totalorder %s159, %s162
      %p171 = scmp.eq.s32.totalorder %s28, 1
      %p172 = por %p170, %p171
      %p173 = scmp.ne.s32.totalorder %s162, %s163
      %p174 = scmp.eq.s32.totalorder %s28, 0
      %p175 = por %p173, %p174
      %p176 = scmp.ne.s32.totalorder %s162, %s163
      %p177 = scmp.eq.s32.totalorder %s29, 1
      %p178 = por %p176, %p177
      %p180 = scmp.ne.s32.totalorder %s163, %s179
      %p181 = scmp.eq.s32.totalorder %s29, 0
      %p182 = por %p180, %p181
      %s184 = sadd.s32 %s183, 1
      %p187 = scmp.eq.s32.totalorder %s23, 1
      %p188 = scmp.ne.s32.totalorder %s183, %s185
      %p189 = scmp.eq.s32.totalorder %s23, 0
      %p190 = por %p188, %p189
      %p191 = scmp.ne.s32.totalorder %s183, %s185
      %p192 = scmp.eq.s32.totalorder %s28, 1
      %p193 = por %p191, %p192
      %p194 = scmp.ne.s32.totalorder %s185, %s186
      %p195 = scmp.eq.s32.totalorder %s28, 0
      %p196 = por %p194, %p195
      %p197 = scmp.ne.s32.totalorder %s185, %s186
      %p198 = scmp.eq.s32.totalorder %s29, 1
      %p199 = por %p197, %p198
      %p201 = scmp.ne.s32.totalorder %s186, %s200
      %p202 = scmp.eq.s32.totalorder %s29, 0
      %p203 = por %p201, %p202
      %s204 = ssub.s32 %s23, %s30
      %p205 = scmp.eq.s32.totalorder %s204, 0
      %s207 = sadd.s32 %s206, 1
      %s208 = scalar_select %p205, %s206, %s207
      %p211 = pneg %p205
      %p212 = scmp.eq.s32.totalorder %s23, 1
      %p213 = por %p211, %p212
      %p214 = scmp.ne.s32.totalorder %s206, %s209
      %p215 = scmp.eq.s32.totalorder %s23, 0
      %p216 = por %p214, %p215
      %p217 = scmp.ne.s32.totalorder %s206, %s209
      %p218 = scmp.eq.s32.totalorder %s28, 1
      %p219 = por %p217, %p218
      %p220 = scmp.ne.s32.totalorder %s209, %s210
      %p221 = scmp.eq.s32.totalorder %s28, 0
      %p222 = por %p220, %p221
      %p223 = scmp.ne.s32.totalorder %s209, %s210
      %p224 = scmp.eq.s32.totalorder %s29, 1
      %p225 = por %p223, %p224
      %p227 = scmp.ne.s32.totalorder %s210, %s226
      %p228 = scmp.eq.s32.totalorder %s29, 0
      %p229 = por %p227, %p228
      %p230 = scmp.le.s32.totalorder 1, %s23
      %p231 = scmp.lt.s32.totalorder %s23, 3
      %p232 = pnand %p230, %p231
      %p233 = pneg %p232
      // Predicated region
      $region9: #{tpu_custom_call.1} parent=5 // pred_check
        _
      $region10: #{tpu_custom_call.1} parent=5 // pred_check_branch
        %235 = sbr.rel (%p232) target = $region12
      $region11: #{tpu_custom_call.1} parent=5 // pred_region
        %s236 = ssub.s32 %s23, 1
        // Predicated region
        $region13: #{tpu_custom_call.1} parent=11 // pred_check
          %p237 = pneg %p70
        $region14: #{tpu_custom_call.1} parent=11 // pred_check_branch
          %239 = sbr.rel (%p237) target = $region16
        $region15: #{tpu_custom_call.1} parent=11 // pred_region
          %s241 = ssub.s32 256, 256
          %242 = vsyncadd [#allocation9], %s241
          %s243 = sshll.u32 [#allocation8], 4
          %s244 = int_to_ptr.vmem [resolvable:$true] %s243
          %249 = dma.hbm_to_vmem [thread:$0]  %s2, 256, %s244, [#allocation9], 64, 64, 4
        $region16: #{tpu_custom_call.1} parent=11 // pred_fallthru
          _
        // Predicated region
        $region17: #{tpu_custom_call.1} parent=11 // pred_check
          %p250 = pneg %p91
        $region18: #{tpu_custom_call.1} parent=11 // pred_check_branch
          %252 = sbr.rel (%p250) target = $region20
        $region19: #{tpu_custom_call.1} parent=11 // pred_region
          _
        $region20: #{tpu_custom_call.1} parent=11 // pred_fallthru
          _
        // Predicated region
        $region21: #{tpu_custom_call.1} parent=11 // pred_check
          %p253 = pneg %p119
        $region22: #{tpu_custom_call.1} parent=11 // pred_check_branch
          %255 = sbr.rel (%p253) target = $region24
        $region23: #{tpu_custom_call.1} parent=11 // pred_region
          %s256 = sld [smem:[#allocation3]]
          %s258 = ssub.s32 256, 256
          %259 = vsyncadd [#allocation9], %s258
          %s260 = smul.addr %s256, 4
          %s261 = smul.addr %s260, 64
          %s262 = scalar_lea.hbm %s4, %s261
          %s263 = sshll.u32 [#allocation10], 4
          %s264 = int_to_ptr.vmem [resolvable:$true] %s263
          %269 = dma.hbm_to_vmem [thread:$0]  %s262, 256, %s264, [#allocation9], 64, 64, 4
        $region24: #{tpu_custom_call.1} parent=11 // pred_fallthru
          _
        // Predicated region
        $region25: #{tpu_custom_call.1} parent=11 // pred_check
          %p270 = pneg %p147
        $region26: #{tpu_custom_call.1} parent=11 // pred_check_branch
          %272 = sbr.rel (%p270) target = $region28
        $region27: #{tpu_custom_call.1} parent=11 // pred_region
          %s273 = sld [smem:[#allocation3]]
          %p274 = scmp.lt.s32.totalorder %s273, 3
          %s275 = scalar_select %p274, %s273, 3
          %s276 = scalar_lea.vmem %s5, %s275
          %s277 = sld [smem:[#allocation3]]
        $region28: #{tpu_custom_call.1} parent=11 // pred_fallthru
          _
        // Predicated region
        $region29: #{tpu_custom_call.1} parent=11 // pred_check
          %p278 = pneg %p175
        $region30: #{tpu_custom_call.1} parent=11 // pred_check_branch
          %280 = sbr.rel (%p278) target = $region32
        $region31: #{tpu_custom_call.1} parent=11 // pred_region
          %s281 = sld [smem:[#allocation3]]
          %p282 = scmp.lt.s32.totalorder %s281, 3
          %s283 = scalar_select %p282, %s281, 3
          %s284 = scalar_lea.vmem %s6, %s283
          %s285 = sld [smem:[#allocation3]]
        $region32: #{tpu_custom_call.1} parent=11 // pred_fallthru
          _
        // Predicated region
        $region33: #{tpu_custom_call.1} parent=11 // pred_check
          %p286 = pneg %p196
        $region34: #{tpu_custom_call.1} parent=11 // pred_check_branch
          %288 = sbr.rel (%p286) target = $region36
        $region35: #{tpu_custom_call.1} parent=11 // pred_region
          %s290 = ssub.s32 16, 16
          %291 = vsyncadd [#allocation7], %s290
          %s293 = sshll.u32 %s7, 4
          %s294 = int_to_ptr.vmem [resolvable:$true] %s293
          %296 = dma.vmem_to_smem %s294, 16, [#allocation11], [#allocation7]
        $region36: #{tpu_custom_call.1} parent=11 // pred_fallthru
          _
      $region12: #{tpu_custom_call.1} parent=5 // pred_fallthru
        _
      %p297 = scmp.lt.s32.totalorder %s23, 2
      // Predicated region
      $region37: #{tpu_custom_call.1} parent=5 // pred_check
        %p298 = pneg %p297
      $region38: #{tpu_custom_call.1} parent=5 // pred_check_branch
        %300 = sbr.rel (%p298) target = $region40
      $region39: #{tpu_custom_call.1} parent=5 // pred_region
        // Predicated region
        $region41: #{tpu_custom_call.1} parent=39 // pred_check
          %p301 = pneg %p43
        $region42: #{tpu_custom_call.1} parent=39 // pred_check_branch
          %303 = sbr.rel (%p301) target = $region44
        $region43: #{tpu_custom_call.1} parent=39 // pred_region
          %s304 = sand.u32 %s33, 1
          %s305 = scalar_lea.sflag [#allocation5], %s304
          %s306 = sand.u32 %s33, 1
          %s307 = smul.addr %s306, 4
          %s308 = scalar_lea.vmem [#allocation4], %s307
          %s310 = ssub.s32 64, 64
          %311 = vsyncadd %s305, %s310
          %s312 = smul.addr %s23, 64
          %s313 = scalar_lea.hbm %s1, %s312
          %s315 = sshll.u32 %s308, 4
          %s316 = int_to_ptr.vmem [resolvable:$true] %s315
          %318 = dma.hbm_to_vmem [thread:$0]  %s313, 64, %s316, %s305
        $region44: #{tpu_custom_call.1} parent=39 // pred_fallthru
          _
      $region40: #{tpu_custom_call.1} parent=5 // pred_fallthru
        _
      %p319 = scmp.le.s32.totalorder 1, %s23
      %p320 = scmp.lt.s32.totalorder %s23, 3
      %p321 = pnand %p319, %p320
      %p322 = pneg %p321
      // Predicated region
      $region45: #{tpu_custom_call.1} parent=5 // pred_check
        _
      $region46: #{tpu_custom_call.1} parent=5 // pred_check_branch
        %324 = sbr.rel (%p321) target = $region48
      $region47: #{tpu_custom_call.1} parent=5 // pred_region
        %s325 = ssub.s32 %s23, 1
        %s326 = sand.u32 %s36, 1
        %s327 = scalar_lea.sflag [#allocation5], %s326
        %s328 = sand.u32 %s36, 1
        %s329 = smul.addr %s328, 4
        %s330 = scalar_lea.vmem [#allocation4], %s329
        // Predicated region
        $region49: #{tpu_custom_call.1} parent=47 // pred_check
          %p331 = pneg %p49
        $region50: #{tpu_custom_call.1} parent=47 // pred_check_branch
          %333 = sbr.rel (%p331) target = $region52
        $region51: #{tpu_custom_call.1} parent=47 // pred_region
          %334 = dma.done %s327, 64
        $region52: #{tpu_custom_call.1} parent=47 // pred_fallthru
          _
        // Predicated region
        $region53: #{tpu_custom_call.1} parent=47 // pred_check
          %p335 = pneg %p70
        $region54: #{tpu_custom_call.1} parent=47 // pred_check_branch
          %337 = sbr.rel (%p335) target = $region56
        $region55: #{tpu_custom_call.1} parent=47 // pred_region
          %338 = dma.done [#allocation9], 256
        $region56: #{tpu_custom_call.1} parent=47 // pred_fallthru
          _
        // Predicated region
        $region57: #{tpu_custom_call.1} parent=47 // pred_check
          %p339 = pneg %p119
        $region58: #{tpu_custom_call.1} parent=47 // pred_check_branch
          %341 = sbr.rel (%p339) target = $region60
        $region59: #{tpu_custom_call.1} parent=47 // pred_region
          %342 = dma.done [#allocation9], 256
        $region60: #{tpu_custom_call.1} parent=47 // pred_fallthru
          _
        // Predicated region
        $region61: #{tpu_custom_call.1} parent=47 // pred_check
          %p343 = pneg %p196
        $region62: #{tpu_custom_call.1} parent=47 // pred_check_branch
          %345 = sbr.rel (%p343) target = $region64
        $region63: #{tpu_custom_call.1} parent=47 // pred_region
          %346 = dma.done [#allocation7], 16
        $region64: #{tpu_custom_call.1} parent=47 // pred_fallthru
          _
        %347 = sfence
        %s348 = sand.u32 %s36, 1
        %s349 = scalar_lea.sflag [#allocation5], %s348
        %s350 = sand.u32 %s36, 1
        %s351 = smul.addr %s350, 4
        %s352 = scalar_lea.vmem [#allocation4], %s351
        %p353 = pneg %p49
        %p354 = pneg %p46
        %p355 = pneg %p70
        %p356 = pneg %p67
        %p357 = pneg %p91
        %p358 = pneg %p88
        %p359 = pneg %p119
        %p360 = pneg %p116
        %s361 = sld [smem:[#allocation3]]
        %p362 = scmp.lt.s32.totalorder %s361, 3
        %s363 = scalar_select %p362, %s361, 3
        %s364 = scalar_lea.vmem %s5, %s363
        %p365 = pneg %p147
        %p366 = pneg %p144
        %s367 = sld [smem:[#allocation3]]
        %p368 = scmp.lt.s32.totalorder %s367, 3
        %s369 = scalar_select %p368, %s367, 3
        %s370 = scalar_lea.vmem %s6, %s369
        %p371 = pneg %p175
        %p372 = pneg %p172
        %p373 = pneg %p196
        %p374 = pneg %p193
        %p375 = pneg %p222
        %p376 = pneg %p219
        %s377 = sand.u32 %s209, 1
        %s378 = scalar_lea.sflag [#allocation6], %s377
        %s379 = sand.u32 %s209, 1
        %s380 = smul.addr %s379, 8
        %s381 = scalar_lea.vmem [#allocation12], %s380
        %s382 = sld [smem:[#allocation3]]
        %s383 = sld [smem:[#allocation3]]
        %p384 = scmp.lt.s32.totalorder %s383, 3
        %s385 = scalar_select %p384, %s383, 3
        %s386 = scalar_lea.vmem %s5, %s385
        %s387 = sld [smem:[#allocation3]]
        %s388 = sld [smem:[#allocation3]]
        %p389 = scmp.lt.s32.totalorder %s388, 3
        %s390 = scalar_select %p389, %s388, 3
        %s391 = scalar_lea.vmem %s6, %s390
        %s392 = sld [smem:[#allocation3]]
        %s394 = sld [smem:[#allocation3]]
        %v395 = vld [vmem:[%s330] sm:$0xf]
        %v396 = vld [vmem:[#allocation8] sm:$0xf]
        %v397 = vld [vmem:[#allocation8 + $0x4] sm:$0xf]
        %v398 = vld [vmem:[#allocation8 + $0x8] sm:$0xf]
        %v399 = vld [vmem:[#allocation8 + $0xc] sm:$0xf]
        %v400 = vld [vmem:[%s3] sm:$0x1]
        %v402 = vlaneseq
        %v403 = vshrl.u32 %v402, 7
        %v404 = vsub.s32 0, %v403
        %v405 = vrot.slane %v400, %v404
        %v411 = vunpack.c.l.b16 %v396
        %v412 = vunpack.c.l.b16 %v397
        %v413 = vunpack.c.l.b16 %v398
        %v414 = vunpack.c.l.b16 %v399
        %v415 = vpack.c.b16 %v412, %v411
        %v416 = vpack.c.b16 %v414, %v413
        %vm419 = vcmask 261120
        %v421 = vsel %vm419, %v395, 0
        %423 = vmatprep.subr.bf16.mxu0 0
        %424 = vmatpush1.bf16.msra.mxu0 %v415
        %425 = vmatprep.subr.bf16.mxu0 0
        %426 = vmatpush1.bf16.msra.mxu0 %v416
        %427 = vmatprep.subr.bf16.mxu0 0
        %428 = vmatpush1.bf16.msra.mxu0 0
        %429 = vmatprep.subr.bf16.mxu0 0
        %430 = vmatpush1.bf16.msra.mxu0 0
        %431 = vmatprep.subr.bf16.mxu0 0
        %432 = vmatpush1.bf16.msra.mxu0 0
        %433 = vmatprep.subr.bf16.mxu0 0
        %434 = vmatpush1.bf16.msra.mxu0 0
        %435 = vmatprep.subr.bf16.mxu0 0
        %436 = vmatpush1.bf16.msra.mxu0 0
        %437 = vmatprep.subr.bf16.mxu0 0
        %438 = vmatpush1.bf16.msra.mxu0 0
        %439 = vmatprep.subr.bf16.mxu0 0
        %440 = vmatpush1.bf16.msra.mxu0 0
        %441 = vmatprep.subr.bf16.mxu0 0
        %442 = vmatpush1.bf16.msra.mxu0 0
        %443 = vmatprep.subr.bf16.mxu0 0
        %444 = vmatpush1.bf16.msra.mxu0 0
        %445 = vmatprep.subr.bf16.mxu0 0
        %446 = vmatpush1.bf16.msra.mxu0 0
        %447 = vmatprep.subr.bf16.mxu0 0
        %448 = vmatpush1.bf16.msra.mxu0 0
        %449 = vmatprep.subr.bf16.mxu0 0
        %450 = vmatpush1.bf16.msra.mxu0 0
        %451 = vmatprep.subr.bf16.mxu0 0
        %452 = vmatpush1.bf16.msra.mxu0 0
        %453 = vmatprep.subr.bf16.mxu0 0
        %454 = vmatpush1.bf16.msra.mxu0 0
        %455 = vmatprep.mubr.bf16.mxu0 0
        %456 = vmatmul.mubr.bf16.gmra.mrb[0].mxu0 %v421
        %v457 = vpop.f32.mrb[0].mxu0
        %v458 = vadd.f32 %v405, %v457
        %v459 = vpop.f32.mrb[0].mxu0
        %v460 = vpop.f32.mrb[0].mxu0
        %v461 = vpop.f32.mrb[0].mxu0
        %462 = vdwg.mxu0
        %v463 = vmax.f32 %v458, 0.0
        %v464 = vpack.c.bf16 %v463, %v463
        %v465 = vld [vmem:[#allocation10] sm:$0xf]
        %v466 = vld [vmem:[#allocation10 + $0x4] sm:$0xf]
        %v467 = vld [vmem:[#allocation10 + $0x8] sm:$0xf]
        %v468 = vld [vmem:[#allocation10 + $0xc] sm:$0xf]
        %v469 = vld [vmem:[%s386] sm:$0x1]
        %v471 = vlaneseq
        %v472 = vshrl.u32 %v471, 7
        %v473 = vsub.s32 0, %v472
        %v474 = vrot.slane %v469, %v473
        %v480 = vunpack.c.l.b16 %v465
        %v481 = vunpack.c.l.b16 %v466
        %v482 = vunpack.c.l.b16 %v467
        %v483 = vunpack.c.l.b16 %v468
        %v484 = vpack.c.b16 %v481, %v480
        %v485 = vpack.c.b16 %v483, %v482
        %v489 = vsel %vm419, %v464, 0
        %491 = vmatprep.subr.bf16.mxu0 0
        %492 = vmatpush1.bf16.msra.mxu0 %v484
        %493 = vmatprep.subr.bf16.mxu0 0
        %494 = vmatpush1.bf16.msra.mxu0 %v485
        %495 = vmatprep.subr.bf16.mxu0 0
        %496 = vmatpush1.bf16.msra.mxu0 0
        %497 = vmatprep.subr.bf16.mxu0 0
        %498 = vmatpush1.bf16.msra.mxu0 0
        %499 = vmatprep.subr.bf16.mxu0 0
        %500 = vmatpush1.bf16.msra.mxu0 0
        %501 = vmatprep.subr.bf16.mxu0 0
        %502 = vmatpush1.bf16.msra.mxu0 0
        %503 = vmatprep.subr.bf16.mxu0 0
        %504 = vmatpush1.bf16.msra.mxu0 0
        %505 = vmatprep.subr.bf16.mxu0 0
        %506 = vmatpush1.bf16.msra.mxu0 0
        %507 = vmatprep.subr.bf16.mxu0 0
        %508 = vmatpush1.bf16.msra.mxu0 0
        %509 = vmatprep.subr.bf16.mxu0 0
        %510 = vmatpush1.bf16.msra.mxu0 0
        %511 = vmatprep.subr.bf16.mxu0 0
        %512 = vmatpush1.bf16.msra.mxu0 0
        %513 = vmatprep.subr.bf16.mxu0 0
        %514 = vmatpush1.bf16.msra.mxu0 0
        %515 = vmatprep.subr.bf16.mxu0 0
        %516 = vmatpush1.bf16.msra.mxu0 0
        %517 = vmatprep.subr.bf16.mxu0 0
        %518 = vmatpush1.bf16.msra.mxu0 0
        %519 = vmatprep.subr.bf16.mxu0 0
        %520 = vmatpush1.bf16.msra.mxu0 0
        %521 = vmatprep.subr.bf16.mxu0 0
        %522 = vmatpush1.bf16.msra.mxu0 0
        %523 = vmatprep.mubr.bf16.mxu0 0
        %524 = vmatmul.mubr.bf16.gmra.mrb[0].mxu0 %v489
        %v525 = vpop.f32.mrb[0].mxu0
        %v526 = vadd.f32 %v474, %v525
        %v527 = vpop.f32.mrb[0].mxu0
        %v528 = vpop.f32.mrb[0].mxu0
        %v529 = vpop.f32.mrb[0].mxu0
        %530 = vdwg.mxu0
        %v531 = vlaneseq
        %v532 = vand.u32 %v531, 127
        %vm533 = vcmp.lt.s32.totalorder %v532, 4
        %v534 = vsel %vm533, %v526, -1e+30
        %535 = vmax.xlane.f32.xlu0 %v534
        %v536 = vpop.xlane.xlu0 %535
        %v537 = vsub.f32 %v534, %v536
        %v538 = vmul.f32 %v537, 1.442695
        %v539 = vpow.pop %v538
        %540 = vadd.xlane.f32.xlu0 %v539
        %v541 = vpop.xlane.xlu0 %540
        %v542 = vstv %s394
        %vm543 = vcmp.eq.s32.totalorder %v532, %v542
        %v544 = vsel %vm543, %v539, 0.0
        %545 = vadd.xlane.f32.xlu0 %v544
        %v546 = vpop.xlane.xlu0 %545
        %v547 = vrcp.pop %v541
        %v548 = vmul.f32 %v546, %v547
        %v549 = vmul.f32 %v526, %v548
        %v550 = vmax.f32 %v549, 0.0
        %v551 = vld [vmem:[%s391] sm:$0x1]
        %v553 = vlaneseq
        %v554 = vshrl.u32 %v553, 7
        %v555 = vsub.s32 0, %v554
        %v556 = vrot.slane %v551, %v555
        %v558 = vmul.f32 %v550, %v556
        %559 = vadd.xlane.f32.xlu0 %v558
        %v560 = vpop.xlane.xlu0 %559
        %s561 = sld [smem:[#allocation11 + %s394]]
        %v562 = vstv %s561
        %v563 = vadd.f32 %v560, %v562
        %564 = vst [vmem:[%s381] sm:$0xff] %v563
        %s565 = sand.u32 %s209, 1
        %s566 = scalar_lea.sflag [#allocation6], %s565
        %s567 = sand.u32 %s209, 1
        %s568 = smul.addr %s567, 8
        %s569 = scalar_lea.vmem [#allocation12], %s568
        // Predicated region
        $region65: #{tpu_custom_call.1} parent=47 // pred_check
          %p570 = pneg %p219
        $region66: #{tpu_custom_call.1} parent=47 // pred_check_branch
          %572 = sbr.rel (%p570) target = $region68
        $region67: #{tpu_custom_call.1} parent=47 // pred_region
          %s574 = ssub.s32 128, 128
          %575 = vsyncadd %s566, %s574
          %s576 = smul.addr %s28, 128
          %s577 = scalar_lea.hbm %s8, %s576
          %s579 = sshll.u32 %s569, 4
          %s580 = int_to_ptr.vmem [resolvable:$true] %s579
          %582 = dma.vmem_to_hbm [thread:$0]  %s580, 128, %s577, %s566
        $region68: #{tpu_custom_call.1} parent=47 // pred_fallthru
          _
      $region48: #{tpu_custom_call.1} parent=5 // pred_fallthru
        _
      %p583 = scmp.le.s32.totalorder 2, %s23
      // Predicated region
      $region69: #{tpu_custom_call.1} parent=5 // pred_check
        %p584 = pneg %p583
      $region70: #{tpu_custom_call.1} parent=5 // pred_check_branch
        %586 = sbr.rel (%p584) target = $region72
      $region71: #{tpu_custom_call.1} parent=5 // pred_region
        %s587 = ssub.s32 %s23, 2
        // Predicated region
        $region73: #{tpu_custom_call.1} parent=71 // pred_check
          %p588 = pneg %p225
        $region74: #{tpu_custom_call.1} parent=71 // pred_check_branch
          %590 = sbr.rel (%p588) target = $region76
        $region75: #{tpu_custom_call.1} parent=71 // pred_region
          %s591 = sand.u32 %s210, 1
          %s592 = scalar_lea.sflag [#allocation6], %s591
          %s593 = sand.u32 %s210, 1
          %s594 = smul.addr %s593, 8
          %s595 = scalar_lea.vmem [#allocation12], %s594
          %596 = dma.done %s592, 128
        $region76: #{tpu_custom_call.1} parent=71 // pred_fallthru
          _
      $region72: #{tpu_custom_call.1} parent=5 // pred_fallthru
        _
    $region6: #{tpu_custom_call.1} parent=1 // loop_footer
      %s27 = sadd.s32 1, %s23
    $region7: #{tpu_custom_call.1} parent=1 // loop_footer_branch
      %22 = sbr.rel target = $region3
    $region8: #{tpu_custom_call.1} parent=1 // loop_exit
      _
    %597 = vsyncpa [#allocation5], 1
    %s598 = scalar_lea.sflag [#allocation5], 1
    %599 = vsyncpa %s598, 1
    %600 = vsyncpa [#allocation9], 1
    %601 = vsyncpa [#allocation6], 1
    %s602 = scalar_lea.sflag [#allocation6], 1
    %603 = vsyncpa %s602, 1
    %604 = vsyncpa [#allocation7], 1
    %s605 = scalar_lea.sflag [#allocation7], 1
    %606 = vsyncpa %s605, 1

</llo_original>
